<compile_context>
chip_gen: v6e
topology: v6e:2x2x1
jax: 0.10.0
libtpu: 0.0.40
codegen_flags: <defaults>
</compile_context>

<pallas_src>
import jax
import jax.numpy as jnp
from jax import lax
from jax.experimental import pallas as pl
from jax.experimental.pallas import tpu as pltpu

LANES = 128
MAX_BLOCK_ROWS = 4096   # 4096 x 128 f32 tile = 2 MiB (4 MiB double-buffered)
CHUNK_ROWS = 256        # per-iteration sublane chunk inside a block


def _num_tensorcores_per_chip() -> int:
    """Best-effort TensorCores per chip: 2 on v7x, 1 on v5e/v6e."""
    # TODO(synk): switch to pltpu.get_tpu_info() once a stable core-count field exists.
    try:
        kind = jax.devices()[0].device_kind.lower()
    except Exception:
        return 1
    return 2 if "v7" in kind else 1


def _make_kernel(block_rows, acc_rows, chunk_rows, num_full_chunks, rem_rows,
                 steps_per_part, rows, needs_mask):
    """Kernel accumulating sum(min(x, 0)) of its block into o_ref (per part)."""

    def chunk_sum(x_ref, blk, start, nrows, masked):
        x = x_ref[pl.ds(start, nrows), :].astype(jnp.float32)   # per-chunk upcast
        v = jnp.minimum(x, 0.0)            # sum(min(x,0)) == -sum(relu(-x))
        if masked:
            # Row-granular validity mask (array is 128-lane aligned, so a row is
            # either fully valid or fully out of range). Covers the ragged last
            # block and any clamped duplicate block (blk beyond total_steps).
            row0 = blk * block_rows + start
            ids = row0 + lax.broadcasted_iota(jnp.int32, (nrows, LANES), 0)
            v = jnp.where(ids < rows, v, 0.0)
        # Fold onto (acc_rows, LANES) with VPU adds only.
        return v.reshape(nrows // acc_rows, acc_rows, LANES).sum(axis=0)

    def block_sum(x_ref, blk, masked):
        acc = jnp.zeros((acc_rows, LANES), jnp.float32)
        if num_full_chunks == 1:
            acc = acc + chunk_sum(x_ref, blk, 0, chunk_rows, masked)
        else:
            def body(i, a):
                start = pl.multiple_of(i * chunk_rows, chunk_rows)
                return a + chunk_sum(x_ref, blk, start, chunk_rows, masked)
            acc = lax.fori_loop(0, num_full_chunks, body, acc, unroll=True)
        if rem_rows:
            acc = acc + chunk_sum(x_ref, blk, num_full_chunks * chunk_rows,
                                  rem_rows, masked)
        return acc

    def kernel(x_ref, o_ref):
        part = pl.program_id(0)
        step = pl.program_id(1)
        blk = part * steps_per_part + step      # logical block id

        @pl.when(step == 0)
        def _init():
            o_ref[...] = jnp.zeros_like(o_ref)

        if not needs_mask:
            # Every block is full and in range: single unmasked path.
            o_ref[...] += block_sum(x_ref, blk, masked=False)[None]
        else:
            # Only the ragged / out-of-range block(s) pay the mask cost.
            is_full = (blk + 1) * block_rows <= rows

            @pl.when(is_full)
            def _fast():
                o_ref[...] += block_sum(x_ref, blk, masked=False)[None]

            @pl.when(jnp.logical_not(is_full))
            def _ragged():
                o_ref[...] += block_sum(x_ref, blk, masked=True)[None]

    return kernel


def deep_poly_alpha_loss(lower_bound: jax.Array) -> jax.Array:
    """JAX/Pallas equivalent of DeepPolyAlphaLoss.forward. Returns a scalar."""
    x = lower_bound.reshape(-1)        # flatten; free, keeps the HBM dtype
    n = x.shape[0]
    rows = n // LANES
    n_main = rows * LANES

    # <128-element ragged tail: tiny plain-JAX reduction instead of jnp.pad
    # (pad would re-materialize the whole array ~3x traffic for a mem-bound op).
    neg_tail = 0.0
    if n_main < n:
        neg_tail = jnp.sum(jnp.minimum(x[n_main:].astype(jnp.float32), 0.0))
    # TODO(synk): for unaligned n the prefix slice below still copies the prefix
    # once; a manual-DMA (pl.ANY) path could make it fully copy-free.

    if rows == 0:
        return jnp.log(-neg_tail)

    x2d = (x if n_main == n else x[:n_main]).reshape(rows, LANES)

    block_rows = min(MAX_BLOCK_ROWS, rows)
    if block_rows % 8 == 0:
        acc_rows = 8
        chunk_rows = min(CHUNK_ROWS, block_rows)
    else:
        # Single full-array block with a ragged sublane count (rare, small).
        acc_rows = block_rows
        chunk_rows = block_rows
    num_full_chunks = block_rows // chunk_rows
    rem_rows = block_rows % chunk_rows

    total_steps = pl.cdiv(rows, block_rows)
    num_parts = min(_num_tensorcores_per_chip(), total_steps)
    steps_per_part = pl.cdiv(total_steps, num_parts)
    needs_mask = (num_parts * steps_per_part * block_rows) != rows

    def in_index_map(part, step):
        # Clamp so the DMA always targets a valid block; logically out-of-range
        # (duplicate) steps contribute zero via the in-kernel mask.
        return (jnp.minimum(part * steps_per_part + step, total_steps - 1), 0)

    part_sem = pltpu.CORE_PARALLEL if num_parts > 1 else pltpu.ARBITRARY

    partials = pl.pallas_call(
        _make_kernel(block_rows, acc_rows, chunk_rows, num_full_chunks,
                     rem_rows, steps_per_part, rows, needs_mask),
        out_shape=jax.ShapeDtypeStruct((num_parts, acc_rows, LANES), jnp.float32),
        grid_spec=pltpu.PrefetchScalarGridSpec(
            num_scalar_prefetch=0,
            grid=(num_parts, steps_per_part),
            in_specs=[pl.BlockSpec((block_rows, LANES), in_index_map)],
            out_specs=pl.BlockSpec((1, acc_rows, LANES),
                                   lambda part, step: (part, 0, 0)),
        ),
        compiler_params=pltpu.CompilerParams(
            dimension_semantics=(part_sem, pltpu.ARBITRARY),
        ),
    )(x2d)

    # Kernel accumulated sum(min(x, 0)) == -sum(relu(-x)); negate once, then the
    # single cross-lane/sublane reduction + log happen here, outside the kernel.
    return jnp.log(-(jnp.sum(partials) + neg_tail))


def _reference(lower_bound: jax.Array) -> jax.Array:
    x = jnp.squeeze(lower_bound)
    return jnp.log(jnp.sum(jax.nn.relu(-x)))


if __name__ == "__main__":
    key = jax.random.PRNGKey(0)
    k1, k2, k3 = jax.random.split(key, 3)

    # Small shape consistent with the module's bound tensor (batch=2, ch=4, 16x16).
    lb_small = jax.random.normal(k1, (2, 4, 16, 16), dtype=jnp.float32)
    out_small = deep_poly_alpha_loss(lb_small)
    jax.block_until_ready(out_small)
    ref_small = _reference(lb_small)
    assert jnp.allclose(out_small, ref_small, rtol=1e-5, atol=1e-5), (out_small, ref_small)

    # Multi-block grid + unmasked fast path + masked ragged last block + <128-elem tail.
    lb_med = jax.random.normal(k2, (2, 3, 300, 300), dtype=jnp.float32)
    out_med = deep_poly_alpha_loss(lb_med)
    jax.block_until_ready(out_med)
    ref_med = _reference(lb_med)
    assert jnp.allclose(out_med, ref_med, rtol=1e-5, atol=1e-5), (out_med, ref_med)

    # Tiny input below one 128-lane row: pure-JAX tail path.
    lb_tiny = jax.random.normal(k3, (1, 5), dtype=jnp.float32)
    out_tiny = deep_poly_alpha_loss(lb_tiny)
    jax.block_until_ready(out_tiny)
    ref_tiny = _reference(lb_tiny)
    assert jnp.allclose(out_tiny, ref_tiny, rtol=1e-5, atol=1e-5), (out_tiny, ref_tiny)

    print("KERNEL_OK")
</pallas_src>

<mosaic_0001>
module attributes {stable_mosaic.version = 11 : i64} {
  func.func @kernel(%arg0: i32, %arg1: i32, %arg2: memref<16x128xf32, #tpu.memory_space<vmem>>, %arg3: memref<1x8x128xf32, #tpu.memory_space<vmem>>) attributes {dimension_semantics = [#tpu.dimension_semantics<arbitrary>, #tpu.dimension_semantics<arbitrary>], iteration_bounds = array<i64: 1, 1>, scalar_prefetch = 0 : i64, scratch_operands = 0 : i64, tpu.core_type = #tpu.core_type<tc>, window_params = [{transform_indices = @transform_0, window_bounds = array<i64: 16, 128>}, {transform_indices = @transform_1, window_bounds = array<i64: 1, 8, 128>}]} {
    %c0_i32 = arith.constant 0 : i32
    %0 = arith.cmpi eq, %arg1, %c0_i32 : i32
    %1 = arith.extui %0 : i1 to i32
    %c0_i32_0 = arith.constant 0 : i32
    %2 = arith.cmpi ne, %1, %c0_i32_0 : i32
    scf.if %2 {
      %cst_10 = arith.constant 0.000000e+00 : f32
      %14 = vector.broadcast %cst_10 : f32 to vector<1x8x128xf32>
      %c0_11 = arith.constant 0 : index
      %c0_12 = arith.constant 0 : index
      %c0_13 = arith.constant 0 : index
      %15 = vector.load %arg3[%c0_11, %c0_12, %c0_13] : memref<1x8x128xf32, #tpu.memory_space<vmem>>, vector<1x8x128xf32>
      tpu.vector_store %arg3[%c0_11, %c0_12, %c0_13], %14 {strides = array<i32>} : memref<1x8x128xf32, #tpu.memory_space<vmem>>, vector<1x8x128xf32>,
    } else {
    }
    %c0 = arith.constant 0 : index
    %c0_1 = arith.constant 0 : index
    %c0_2 = arith.constant 0 : index
    %3 = vector.load %arg3[%c0, %c0_1, %c0_2] : memref<1x8x128xf32, #tpu.memory_space<vmem>>, vector<1x8x128xf32>
    %cst = arith.constant 0.000000e+00 : f32
    %4 = vector.broadcast %cst : f32 to vector<8x128xf32>
    %c0_3 = arith.constant 0 : index
    %c0_4 = arith.constant 0 : index
    %5 = vector.load %arg2[%c0_3, %c0_4] : memref<16x128xf32, #tpu.memory_space<vmem>>, vector<16x128xf32>
    %cst_5 = arith.constant 0.000000e+00 : f32
    %6 = vector.broadcast %cst_5 : f32 to vector<16x128xf32>
    %7 = arith.minimumf %5, %6 : vector<16x128xf32>
    %8 = vector.shape_cast %7 : vector<16x128xf32> to vector<2x8x128xf32>
    %cst_6 = arith.constant dense<0.000000e+00> : vector<8x128xf32>
    %9 = vector.multi_reduction <add>, %8, %cst_6 [0] : vector<2x8x128xf32> to vector<8x128xf32>
    %10 = arith.addf %4, %9 : vector<8x128xf32>
    %11 = vector.shape_cast %10 : vector<8x128xf32> to vector<1x8x128xf32>
    %12 = arith.addf %3, %11 : vector<1x8x128xf32>
    %c0_7 = arith.constant 0 : index
    %c0_8 = arith.constant 0 : index
    %c0_9 = arith.constant 0 : index
    %13 = vector.load %arg3[%c0_7, %c0_8, %c0_9] : memref<1x8x128xf32, #tpu.memory_space<vmem>>, vector<1x8x128xf32>
    tpu.vector_store %arg3[%c0_7, %c0_8, %c0_9], %12 {strides = array<i32>} : memref<1x8x128xf32, #tpu.memory_space<vmem>>, vector<1x8x128xf32>,
    return
  }
  func.func @transform_0(%arg0: i32, %arg1: i32) -> (i32, i32) {
    %c1_i32 = arith.constant 1 : i32
    %0 = arith.muli %arg0, %c1_i32 : i32
    %1 = arith.addi %0, %arg1 : i32
    %c0_i32 = arith.constant 0 : i32
    %2 = arith.minsi %1, %c0_i32 : i32
    %c0_i32_0 = arith.constant 0 : i32
    %c0_i32_1 = arith.constant 0 : i32
    return %2, %c0_i32_0 : i32, i32
  }
  func.func @transform_1(%arg0: i32, %arg1: i32) -> (i32, i32, i32) {
    %c0_i32 = arith.constant 0 : i32
    %c0_i32_0 = arith.constant 0 : i32
    %c0_i32_1 = arith.constant 0 : i32
    return %arg0, %c0_i32, %c0_i32_0 : i32, i32, i32
  }
}

</mosaic_0001>

<llo_original>
// kernel: tpu_custom_call.1
$region0: #{tpu_custom_call.1}
  #allocation0 [shape = 'u32[]', space=smem, size = 0x4, offset = 0x4, fixed_abs, tag = 'smem constant byte address 0x4 - core index']
  #allocation1 [shape = 'u32[144,128]{1,0:T(1,128)}', space=vmem, size = 0x12000, scoped, tag = 'internal scratch']
  %s0 = inlined_call_operand.hbm [shape: f32[16,128], index: 0, kind: input, shape index: {}]
  %s1 = inlined_call_operand.hbm [shape: f32[1,8,128], index: 1, kind: output, shape index: {}]
  %s2 = sld [smem:[#allocation0]]
  $region22: #{tpu_custom_call.1} parent=0
    _
  %s4 = ssub.s32 1, %s2
  %s5 = scalar_select 0, %s4, %s2
  $region1: #{tpu_custom_call.1} parent=0
    #allocation2 [shape = 'u8[8192]{0}', space=vmem, size = 0x2000, scoped, tag = 'input window, operand 0, single buffered']
    #allocation3 [shape = 's32[1]{0}', space=sflag, size = 0x4, scoped, tag = 'scoped memory for tpu_custom_call.1']
    #allocation4 [shape = 's32[1]{0}', space=sflag, size = 0x4, scoped, tag = 'scoped memory for tpu_custom_call.1']
    #allocation5 [shape = 'u8[4096]{0}', space=vmem, size = 0x1000, scoped, tag = 'output window, operand 0, single buffered']
    %6 = vsyncpa [#allocation3], 0
    %7 = vsyncpa [#allocation4], 0
    // Predicated region
    $region2: #{tpu_custom_call.1} parent=1 // pred_check
      _
    $region3: #{tpu_custom_call.1} parent=1 // pred_check_branch
      %9 = sbr.rel (0) target = $region5
    $region4: #{tpu_custom_call.1} parent=1 // pred_region
      %s10 = sadd.s32 0, 0
      %p11 = scmp.lt.s32.totalorder %s10, 0
      %s12 = scalar_select %p11, %s10, 0
      %s13 = smul.u32 2, %s12
      %s15 = ssub.s32 256, 256
      %16 = vsyncadd [#allocation3], %s15
      %s17 = smul.addr %s13, 128
      %s18 = scalar_lea.hbm %s0, %s17
      %s19 = sshll.u32 [#allocation2], 4
      %s20 = int_to_ptr.vmem [resolvable:$true] %s19
      %25 = dma.hbm_to_vmem [thread:$0]  %s18, 256, %s20, [#allocation3], 128, 128, 8
    $region5: #{tpu_custom_call.1} parent=1 // pred_fallthru
      _
    // Predicated region
    $region6: #{tpu_custom_call.1} parent=1 // pred_check
      _
    $region7: #{tpu_custom_call.1} parent=1 // pred_check_branch
      %27 = sbr.rel (0) target = $region9
    $region8: #{tpu_custom_call.1} parent=1 // pred_region
      %28 = dma.done [#allocation3], 256
    $region9: #{tpu_custom_call.1} parent=1 // pred_fallthru
      _
    %s29 = sadd.s32 0, 0
    %p30 = scmp.lt.s32.totalorder %s29, 0
    %s31 = scalar_select %p30, %s29, 0
    %s32 = smul.u32 2, %s31
    %p33 = scmp.eq.s32.totalorder 0, 0
    // Predicated region
    $region10: #{tpu_custom_call.1} parent=1 // pred_check
      %p34 = pneg %p33
    $region11: #{tpu_custom_call.1} parent=1 // pred_check_branch
      %36 = sbr.rel (%p34) target = $region13
    $region12: #{tpu_custom_call.1} parent=1 // pred_region
      %37 = vst [vmem:[#allocation5] sm:$0xff] 0.0
    $region13: #{tpu_custom_call.1} parent=1 // pred_fallthru
      _
    %v38 = vld [vmem:[#allocation5] sm:$0xff]
    %v39 = vld [vmem:[#allocation2] sm:$0xff]
    %v40 = vld [vmem:[#allocation2 + $0x8] sm:$0xff]
    %v41 = vmin.f32 %v39, 0.0
    %v42 = vmin.f32 %v40, 0.0
    %v43 = vadd.f32 %v41, %v42
    %v44 = vadd.f32 %v43, 0.0
    %v45 = vadd.f32 %v38, %v44
    %46 = vst [vmem:[#allocation5] sm:$0xff] %v45
    // Predicated region
    $region14: #{tpu_custom_call.1} parent=1 // pred_check
      _
    $region15: #{tpu_custom_call.1} parent=1 // pred_check_branch
      %48 = sbr.rel (0) target = $region17
    $region16: #{tpu_custom_call.1} parent=1 // pred_region
      %s50 = ssub.s32 128, 128
      %51 = vsyncadd [#allocation4], %s50
      %s53 = sshll.u32 [#allocation5], 4
      %s54 = int_to_ptr.vmem [resolvable:$true] %s53
      %56 = dma.vmem_to_hbm [thread:$0]  %s54, 128, %s1, [#allocation4]
    $region17: #{tpu_custom_call.1} parent=1 // pred_fallthru
      _
    // Predicated region
    $region18: #{tpu_custom_call.1} parent=1 // pred_check
      _
    $region19: #{tpu_custom_call.1} parent=1 // pred_check_branch
      %58 = sbr.rel (0) target = $region21
    $region20: #{tpu_custom_call.1} parent=1 // pred_region
      %59 = dma.done [#allocation4], 128
    $region21: #{tpu_custom_call.1} parent=1 // pred_fallthru
      _
    %60 = vsyncpa [#allocation3], 1
    %61 = vsyncpa [#allocation4], 1

</llo_original>
